<compile_context>
chip_gen: v5e
topology: v5e:2x2
jax: 0.10.0
libtpu: 0.0.40
codegen_flags: <defaults>
</compile_context>

<pallas_src>
import functools

import jax
import jax.numpy as jnp
from jax.experimental import pallas as pl
from jax.experimental.pallas import tpu as pltpu

_LANE = 128          # lane width of a vreg (last dim)
_SUBLANE_BF16 = 16   # bf16 packs 16 sublanes per vreg -> batch-tile alignment


def _round_up(x, m):
    return ((x + m - 1) // m) * m


# ----------------------------------------------------------------------------
# Fused MLP kernel: chains (matmul + bias + ReLU) over every layer with all
# padded weights resident in VMEM.  refs = (x, w0, b0, w1, b1, ..., out).
# ----------------------------------------------------------------------------
def _mlp_kernel(*refs, num_linear: int):
    x_ref = refs[0]
    out_ref = refs[-1]
    wb_refs = refs[1:-1]

    h = x_ref[...]                                   # (TB, Din) bf16
    for li in range(num_linear):
        w = wb_refs[2 * li][...]                     # (Din_p, Dout_p) bf16
        b = wb_refs[2 * li + 1][...]                 # (1, Dout_p) f32
        # bf16 x bf16 on the MXU, f32 accumulate; bias added in f32.
        acc = jnp.dot(h, w, preferred_element_type=jnp.float32) + b
        if li < num_linear - 1:                      # no activation on fc3
            # Keep the running activation bf16 so the inter-layer VMEM
            # spill/reload is half-size and the next matmul is bf16 x bf16.
            h = jnp.maximum(acc, 0.0).astype(jnp.bfloat16)
        else:
            out_ref[...] = acc.astype(out_ref.dtype)


# ----------------------------------------------------------------------------
# Parameter init (deterministic, mirrors nn.Linear fan-in uniform init)
# ----------------------------------------------------------------------------
def init_dnn_params(key, input_dim, hidden_dim, n_layers, output_dim,
                    dtype=jnp.float32):
    params = []
    dims = ([(input_dim, hidden_dim)]
            + [(hidden_dim, hidden_dim)] * n_layers
            + [(hidden_dim, output_dim)])
    for (din, dout) in dims:
        key, kw, kb = jax.random.split(key, 3)
        bound = 1.0 / jnp.sqrt(jnp.float32(din))
        w = jax.random.uniform(kw, (din, dout), dtype, -bound, bound)
        b = jax.random.uniform(kb, (dout,), dtype, -bound, bound)
        params.append((w, b))
    return params


def _pad_params(params, compute_dtype=jnp.bfloat16):
    """Zero-pad feature dims to 128 lanes; weights in bf16, biases in f32.

    Layer 0 keeps its real input row count (the x slab is not lane-padded
    along the contraction dim; Mosaic pads the short contraction internally).
    """
    padded = []
    for li, (w, b) in enumerate(params):
        din, dout = w.shape
        dip = din if li == 0 else _round_up(din, _LANE)
        dop = _round_up(dout, _LANE)
        wp = jnp.zeros((dip, dop), compute_dtype).at[:din, :dout].set(
            w.astype(compute_dtype))
        bp = jnp.zeros((1, dop), jnp.float32).at[0, :dout].set(
            b.astype(jnp.float32))
        padded.append((wp, bp))
    return padded


# ----------------------------------------------------------------------------
# Forward: one fused pallas_call for the whole network.
# ----------------------------------------------------------------------------
def dnn_forward(x, params, *, max_rows_per_tile=1024):
    """x: (batch, input_dim, 1)  ->  (batch, output_dim)"""
    B, input_dim = x.shape[0], x.shape[1]
    output_dim = params[-1][0].shape[1]
    num_linear = len(params)

    # PyTorch's x.squeeze(2); cast once to bf16 for the MXU.
    h = jnp.squeeze(x, axis=2).astype(jnp.bfloat16)      # (B, input_dim)

    padded = _pad_params(params)
    dout_p = padded[-1][0].shape[1]

    # Batch tiling derived from B (no rounding B up to a fixed 512 multiple);
    # force >= 2 grid steps for moderately large batches so both TensorCores
    # on v7x get work (a 2-step serial loop is negligible on v5e/v6e).
    nt = pl.cdiv(B, max_rows_per_tile)
    if B >= 16:
        nt = max(nt, 2)
    tb = _round_up(pl.cdiv(B, nt), _SUBLANE_BF16)
    nt = pl.cdiv(B, tb)
    b_p = nt * tb
    if b_p != B:
        h = jnp.pad(h, ((0, b_p - B), (0, 0)))           # rows only, no slab

    grid = (nt,)

    # x block: full (unpadded) last dim is legal; batch dim is tiled.
    in_specs = [pl.BlockSpec((tb, input_dim), lambda i: (i, 0))]
    flat_wb = []
    const_mode = pl.Buffered(1)   # constant index_map -> fetch once, 1 buffer
    for (wp, bp) in padded:
        in_specs.append(
            pl.BlockSpec(wp.shape, lambda i: (0, 0), pipeline_mode=const_mode))
        in_specs.append(
            pl.BlockSpec(bp.shape, lambda i: (0, 0), pipeline_mode=const_mode))
        flat_wb.extend([wp, bp])
    out_spec = pl.BlockSpec((tb, dout_p), lambda i: (i, 0))

    # Advisory cost estimate for XLA's scheduler.
    weight_bytes = sum(wp.size * wp.dtype.itemsize + bp.size * bp.dtype.itemsize
                       for (wp, bp) in padded)
    flops = sum(2 * b_p * wp.shape[0] * wp.shape[1] for (wp, _) in padded)
    bytes_accessed = (h.size * h.dtype.itemsize
                      + weight_bytes
                      + b_p * dout_p * jnp.dtype(x.dtype).itemsize)
    cost = pl.CostEstimate(flops=flops, transcendentals=0,
                           bytes_accessed=bytes_accessed)

    # VMEM budget: resident weights (single-buffered) + double-buffered x/out
    # tiles + a few activation slabs.  Only raise the scoped limit if needed.
    max_feat = max([input_dim] + [wp.shape[1] for (wp, _) in padded])
    vmem_est = (weight_bytes
                + 2 * tb * input_dim * 2          # x tile, double-buffered
                + 2 * tb * dout_p * 4             # out tile, double-buffered
                + 4 * tb * max_feat * 4)          # activation working set
    compiler_kwargs = dict(dimension_semantics=("parallel",))
    if vmem_est > 24 * 1024 * 1024:
        # TODO(synk): for weight sets that exceed even the raised limit
        # (notably on v7x's 64 MiB VMEM), tile the hidden contraction dim with
        # an extra 'arbitrary' grid axis instead of keeping all layers resident.
        compiler_kwargs["vmem_limit_bytes"] = int(
            min(vmem_est * 1.5, 60 * 1024 * 1024))

    out_p = pl.pallas_call(
        functools.partial(_mlp_kernel, num_linear=num_linear),
        out_shape=jax.ShapeDtypeStruct((b_p, dout_p), x.dtype),
        grid=grid,
        in_specs=in_specs,
        out_specs=out_spec,
        compiler_params=pltpu.CompilerParams(**compiler_kwargs),
        cost_estimate=cost,
    )(h, *flat_wb)

    return out_p[:B, :output_dim]


# ----------------------------------------------------------------------------
if __name__ == "__main__":
    input_dim, hidden_dim, n_layers, output_dim = 16, 32, 2, 8
    batch = 4

    key = jax.random.PRNGKey(0)
    key, kparams, kx = jax.random.split(key, 3)
    params = init_dnn_params(kparams, input_dim, hidden_dim, n_layers,
                             output_dim)

    # Input shaped (batch, input_dim, 1) so the .squeeze(2) of the PyTorch
    # forward is meaningful.
    x = jax.random.normal(kx, (batch, input_dim, 1), dtype=jnp.float32)

    fwd = jax.jit(dnn_forward)
    out = jax.block_until_ready(fwd(x, params))

    # Sanity check against a pure-JAX f32 reference (kernel runs bf16 operands
    # with f32 accumulation, hence the relaxed tolerance).
    h_ref = jnp.squeeze(x, axis=2)
    h_ref = jnp.maximum(h_ref @ params[0][0] + params[0][1], 0.0)
    for (w, b) in params[1:-1]:
        h_ref = jnp.maximum(h_ref @ w + b, 0.0)
    ref = h_ref @ params[-1][0] + params[-1][1]

    assert out.shape == (batch, output_dim)
    assert jnp.allclose(out, ref, atol=3e-2, rtol=3e-2), (
        float(jnp.max(jnp.abs(out - ref))))

    print("KERNEL_OK")
</pallas_src>

<mosaic_0001>
module attributes {stable_mosaic.version = 11 : i64} {
  func.func @_mlp_kernel(%arg0: i32, %arg1: memref<16x16xbf16, #tpu.memory_space<vmem>>, %arg2: memref<16x128xbf16, #tpu.memory_space<vmem>>, %arg3: memref<1x128xf32, #tpu.memory_space<vmem>>, %arg4: memref<128x128xbf16, #tpu.memory_space<vmem>>, %arg5: memref<1x128xf32, #tpu.memory_space<vmem>>, %arg6: memref<128x128xbf16, #tpu.memory_space<vmem>>, %arg7: memref<1x128xf32, #tpu.memory_space<vmem>>, %arg8: memref<128x128xbf16, #tpu.memory_space<vmem>>, %arg9: memref<1x128xf32, #tpu.memory_space<vmem>>, %arg10: memref<16x128xf32, #tpu.memory_space<vmem>>) attributes {dimension_semantics = [#tpu.dimension_semantics<parallel>], iteration_bounds = array<i64: 1>, scalar_prefetch = 0 : i64, scratch_operands = 0 : i64, tpu.core_type = #tpu.core_type<tc>, window_params = [{transform_indices = @transform_0, window_bounds = array<i64: 16, 16>}, {pipeline_mode = #tpu.pipeline_mode<synchronous>, transform_indices = @transform_1, window_bounds = array<i64: 16, 128>}, {pipeline_mode = #tpu.pipeline_mode<synchronous>, transform_indices = @transform_2, window_bounds = array<i64: 1, 128>}, {pipeline_mode = #tpu.pipeline_mode<synchronous>, transform_indices = @transform_3, window_bounds = array<i64: 128, 128>}, {pipeline_mode = #tpu.pipeline_mode<synchronous>, transform_indices = @transform_4, window_bounds = array<i64: 1, 128>}, {pipeline_mode = #tpu.pipeline_mode<synchronous>, transform_indices = @transform_5, window_bounds = array<i64: 128, 128>}, {pipeline_mode = #tpu.pipeline_mode<synchronous>, transform_indices = @transform_6, window_bounds = array<i64: 1, 128>}, {pipeline_mode = #tpu.pipeline_mode<synchronous>, transform_indices = @transform_7, window_bounds = array<i64: 128, 128>}, {pipeline_mode = #tpu.pipeline_mode<synchronous>, transform_indices = @transform_8, window_bounds = array<i64: 1, 128>}, {transform_indices = @transform_9, window_bounds = array<i64: 16, 128>}]} {
    %c0 = arith.constant 0 : index
    %c0_0 = arith.constant 0 : index
    %0 = vector.load %arg1[%c0, %c0_0] : memref<16x16xbf16, #tpu.memory_space<vmem>>, vector<16x16xbf16>
    %c0_1 = arith.constant 0 : index
    %c0_2 = arith.constant 0 : index
    %1 = vector.load %arg2[%c0_1, %c0_2] : memref<16x128xbf16, #tpu.memory_space<vmem>>, vector<16x128xbf16>
    %c0_3 = arith.constant 0 : index
    %c0_4 = arith.constant 0 : index
    %2 = vector.load %arg3[%c0_3, %c0_4] : memref<1x128xf32, #tpu.memory_space<vmem>>, vector<1x128xf32>
    %cst = arith.constant dense<0.000000e+00> : vector<16x128xf32>
    %3 = tpu.matmul %0, %1, %cst {dimension_numbers = #tpu.dot_dimension_numbers<[1], [0], [0], [1], [0, 0, 1, 1], [], []>} : vector<16x16xbf16>, vector<16x128xbf16>, vector<16x128xf32> -> vector<16x128xf32>
    %4 = vector.broadcast %2 : vector<1x128xf32> to vector<16x128xf32>
    %5 = arith.addf %3, %4 : vector<16x128xf32>
    %cst_5 = arith.constant 0.000000e+00 : f32
    %6 = vector.broadcast %cst_5 : f32 to vector<16x128xf32>
    %7 = arith.maximumf %5, %6 : vector<16x128xf32>
    %8 = arith.truncf %7 : vector<16x128xf32> to vector<16x128xbf16>
    %c0_6 = arith.constant 0 : index
    %c0_7 = arith.constant 0 : index
    %9 = vector.load %arg4[%c0_6, %c0_7] : memref<128x128xbf16, #tpu.memory_space<vmem>>, vector<128x128xbf16>
    %c0_8 = arith.constant 0 : index
    %c0_9 = arith.constant 0 : index
    %10 = vector.load %arg5[%c0_8, %c0_9] : memref<1x128xf32, #tpu.memory_space<vmem>>, vector<1x128xf32>
    %cst_10 = arith.constant dense<0.000000e+00> : vector<16x128xf32>
    %11 = tpu.matmul %8, %9, %cst_10 {dimension_numbers = #tpu.dot_dimension_numbers<[1], [0], [0], [1], [0, 0, 1, 1], [], []>} : vector<16x128xbf16>, vector<128x128xbf16>, vector<16x128xf32> -> vector<16x128xf32>
    %12 = vector.broadcast %10 : vector<1x128xf32> to vector<16x128xf32>
    %13 = arith.addf %11, %12 : vector<16x128xf32>
    %cst_11 = arith.constant 0.000000e+00 : f32
    %14 = vector.broadcast %cst_11 : f32 to vector<16x128xf32>
    %15 = arith.maximumf %13, %14 : vector<16x128xf32>
    %16 = arith.truncf %15 : vector<16x128xf32> to vector<16x128xbf16>
    %c0_12 = arith.constant 0 : index
    %c0_13 = arith.constant 0 : index
    %17 = vector.load %arg6[%c0_12, %c0_13] : memref<128x128xbf16, #tpu.memory_space<vmem>>, vector<128x128xbf16>
    %c0_14 = arith.constant 0 : index
    %c0_15 = arith.constant 0 : index
    %18 = vector.load %arg7[%c0_14, %c0_15] : memref<1x128xf32, #tpu.memory_space<vmem>>, vector<1x128xf32>
    %cst_16 = arith.constant dense<0.000000e+00> : vector<16x128xf32>
    %19 = tpu.matmul %16, %17, %cst_16 {dimension_numbers = #tpu.dot_dimension_numbers<[1], [0], [0], [1], [0, 0, 1, 1], [], []>} : vector<16x128xbf16>, vector<128x128xbf16>, vector<16x128xf32> -> vector<16x128xf32>
    %20 = vector.broadcast %18 : vector<1x128xf32> to vector<16x128xf32>
    %21 = arith.addf %19, %20 : vector<16x128xf32>
    %cst_17 = arith.constant 0.000000e+00 : f32
    %22 = vector.broadcast %cst_17 : f32 to vector<16x128xf32>
    %23 = arith.maximumf %21, %22 : vector<16x128xf32>
    %24 = arith.truncf %23 : vector<16x128xf32> to vector<16x128xbf16>
    %c0_18 = arith.constant 0 : index
    %c0_19 = arith.constant 0 : index
    %25 = vector.load %arg8[%c0_18, %c0_19] : memref<128x128xbf16, #tpu.memory_space<vmem>>, vector<128x128xbf16>
    %c0_20 = arith.constant 0 : index
    %c0_21 = arith.constant 0 : index
    %26 = vector.load %arg9[%c0_20, %c0_21] : memref<1x128xf32, #tpu.memory_space<vmem>>, vector<1x128xf32>
    %cst_22 = arith.constant dense<0.000000e+00> : vector<16x128xf32>
    %27 = tpu.matmul %24, %25, %cst_22 {dimension_numbers = #tpu.dot_dimension_numbers<[1], [0], [0], [1], [0, 0, 1, 1], [], []>} : vector<16x128xbf16>, vector<128x128xbf16>, vector<16x128xf32> -> vector<16x128xf32>
    %28 = vector.broadcast %26 : vector<1x128xf32> to vector<16x128xf32>
    %29 = arith.addf %27, %28 : vector<16x128xf32>
    %c0_23 = arith.constant 0 : index
    %c0_24 = arith.constant 0 : index
    %30 = vector.load %arg10[%c0_23, %c0_24] : memref<16x128xf32, #tpu.memory_space<vmem>>, vector<16x128xf32>
    tpu.vector_store %arg10[%c0_23, %c0_24], %29 {strides = array<i32>} : memref<16x128xf32, #tpu.memory_space<vmem>>, vector<16x128xf32>,
    return
  }
  func.func @transform_0(%arg0: i32) -> (i32, i32) {
    %c0_i32 = arith.constant 0 : i32
    %c0_i32_0 = arith.constant 0 : i32
    return %arg0, %c0_i32 : i32, i32
  }
  func.func @transform_1(%arg0: i32) -> (i32, i32) {
    %c0_i32 = arith.constant 0 : i32
    %c0_i32_0 = arith.constant 0 : i32
    %c0_i32_1 = arith.constant 0 : i32
    return %c0_i32, %c0_i32_0 : i32, i32
  }
  func.func @transform_2(%arg0: i32) -> (i32, i32) {
    %c0_i32 = arith.constant 0 : i32
    %c0_i32_0 = arith.constant 0 : i32
    %c0_i32_1 = arith.constant 0 : i32
    return %c0_i32, %c0_i32_0 : i32, i32
  }
  func.func @transform_3(%arg0: i32) -> (i32, i32) {
    %c0_i32 = arith.constant 0 : i32
    %c0_i32_0 = arith.constant 0 : i32
    %c0_i32_1 = arith.constant 0 : i32
    return %c0_i32, %c0_i32_0 : i32, i32
  }
  func.func @transform_4(%arg0: i32) -> (i32, i32) {
    %c0_i32 = arith.constant 0 : i32
    %c0_i32_0 = arith.constant 0 : i32
    %c0_i32_1 = arith.constant 0 : i32
    return %c0_i32, %c0_i32_0 : i32, i32
  }
  func.func @transform_5(%arg0: i32) -> (i32, i32) {
    %c0_i32 = arith.constant 0 : i32
    %c0_i32_0 = arith.constant 0 : i32
    %c0_i32_1 = arith.constant 0 : i32
    return %c0_i32, %c0_i32_0 : i32, i32
  }
  func.func @transform_6(%arg0: i32) -> (i32, i32) {
    %c0_i32 = arith.constant 0 : i32
    %c0_i32_0 = arith.constant 0 : i32
    %c0_i32_1 = arith.constant 0 : i32
    return %c0_i32, %c0_i32_0 : i32, i32
  }
  func.func @transform_7(%arg0: i32) -> (i32, i32) {
    %c0_i32 = arith.constant 0 : i32
    %c0_i32_0 = arith.constant 0 : i32
    %c0_i32_1 = arith.constant 0 : i32
    return %c0_i32, %c0_i32_0 : i32, i32
  }
  func.func @transform_8(%arg0: i32) -> (i32, i32) {
    %c0_i32 = arith.constant 0 : i32
    %c0_i32_0 = arith.constant 0 : i32
    %c0_i32_1 = arith.constant 0 : i32
    return %c0_i32, %c0_i32_0 : i32, i32
  }
  func.func @transform_9(%arg0: i32) -> (i32, i32) {
    %c0_i32 = arith.constant 0 : i32
    %c0_i32_0 = arith.constant 0 : i32
    return %arg0, %c0_i32 : i32, i32
  }
}

</mosaic_0001>

<llo_original>
// kernel: dnn_forward.1
$region0: #{dnn_forward.1}
  #allocation0 [shape = 'u32[]', space=smem, size = 0x4, offset = 0x4, fixed_abs, tag = 'smem constant byte address 0x4 - core index']
  #allocation1 [shape = 'u32[72,128]{1,0:T(1,128)}', space=vmem, size = 0x9000, scoped, tag = 'internal scratch']
  %s0 = inlined_call_operand.vmem [shape: bf16[16,16], index: 0, kind: input, shape index: {}]
  %s1 = inlined_call_operand.vmem [shape: bf16[16,128], index: 1, kind: input, shape index: {}]
  %s2 = inlined_call_operand.vmem [shape: f32[1,128], index: 2, kind: input, shape index: {}]
  %s3 = inlined_call_operand.vmem [shape: bf16[128,128], index: 3, kind: input, shape index: {}]
  %s4 = inlined_call_operand.vmem [shape: f32[1,128], index: 4, kind: input, shape index: {}]
  %s5 = inlined_call_operand.vmem [shape: bf16[128,128], index: 5, kind: input, shape index: {}]
  %s6 = inlined_call_operand.vmem [shape: f32[1,128], index: 6, kind: input, shape index: {}]
  %s7 = inlined_call_operand.vmem [shape: bf16[128,128], index: 7, kind: input, shape index: {}]
  %s8 = inlined_call_operand.vmem [shape: f32[1,128], index: 8, kind: input, shape index: {}]
  %s9 = inlined_call_operand.vmem [shape: f32[16,128], index: 9, kind: output, shape index: {}]
  %s10 = sld [smem:[#allocation0]]
  $region46: #{dnn_forward.1} parent=0
    _
  %s12 = ssub.s32 1, %s10
  %s13 = scalar_select 0, %s12, %s10
  // Predicated region
  $region2: #{dnn_forward.1} parent=0 // pred_check
    _
  $region3: #{dnn_forward.1} parent=0 // pred_check_branch
    %15 = sbr.rel (0) target = $region5
  $region4: #{dnn_forward.1} parent=0 // pred_region
    _
  $region5: #{dnn_forward.1} parent=0 // pred_fallthru
    _
  // Predicated region
  $region6: #{dnn_forward.1} parent=0 // pred_check
    _
  $region7: #{dnn_forward.1} parent=0 // pred_check_branch
    %17 = sbr.rel (0) target = $region9
  $region8: #{dnn_forward.1} parent=0 // pred_region
    _
  $region9: #{dnn_forward.1} parent=0 // pred_fallthru
    _
  // Predicated region
  $region10: #{dnn_forward.1} parent=0 // pred_check
    _
  $region11: #{dnn_forward.1} parent=0 // pred_check_branch
    %19 = sbr.rel (0) target = $region13
  $region12: #{dnn_forward.1} parent=0 // pred_region
    _
  $region13: #{dnn_forward.1} parent=0 // pred_fallthru
    _
  // Predicated region
  $region14: #{dnn_forward.1} parent=0 // pred_check
    _
  $region15: #{dnn_forward.1} parent=0 // pred_check_branch
    %21 = sbr.rel (0) target = $region17
  $region16: #{dnn_forward.1} parent=0 // pred_region
    _
  $region17: #{dnn_forward.1} parent=0 // pred_fallthru
    _
  // Predicated region
  $region18: #{dnn_forward.1} parent=0 // pred_check
    _
  $region19: #{dnn_forward.1} parent=0 // pred_check_branch
    %23 = sbr.rel (0) target = $region21
  $region20: #{dnn_forward.1} parent=0 // pred_region
    _
  $region21: #{dnn_forward.1} parent=0 // pred_fallthru
    _
  // Predicated region
  $region22: #{dnn_forward.1} parent=0 // pred_check
    _
  $region23: #{dnn_forward.1} parent=0 // pred_check_branch
    %25 = sbr.rel (0) target = $region25
  $region24: #{dnn_forward.1} parent=0 // pred_region
    _
  $region25: #{dnn_forward.1} parent=0 // pred_fallthru
    _
  // Predicated region
  $region26: #{dnn_forward.1} parent=0 // pred_check
    _
  $region27: #{dnn_forward.1} parent=0 // pred_check_branch
    %27 = sbr.rel (0) target = $region29
  $region28: #{dnn_forward.1} parent=0 // pred_region
    _
  $region29: #{dnn_forward.1} parent=0 // pred_fallthru
    _
  // Predicated region
  $region30: #{dnn_forward.1} parent=0 // pred_check
    _
  $region31: #{dnn_forward.1} parent=0 // pred_check_branch
    %29 = sbr.rel (0) target = $region33
  $region32: #{dnn_forward.1} parent=0 // pred_region
    _
  $region33: #{dnn_forward.1} parent=0 // pred_fallthru
    _
  // Predicated region
  $region34: #{dnn_forward.1} parent=0 // pred_check
    _
  $region35: #{dnn_forward.1} parent=0 // pred_check_branch
    %31 = sbr.rel (0) target = $region37
  $region36: #{dnn_forward.1} parent=0 // pred_region
    _
  $region37: #{dnn_forward.1} parent=0 // pred_fallthru
    _
  %v33 = vld [vmem:[%s0] sm:$0xf]
  %v34 = vld [vmem:[%s0 + $0x4] sm:$0xf]
  %v35 = vld [vmem:[%s1] sm:$0xf]
  %v36 = vld [vmem:[%s1 + $0x4] sm:$0xf]
  %v37 = vld [vmem:[%s2] sm:$0x1]
  %v39 = vperm.slane %v37, 0
  %v43 = vunpack.c.l.b16 %v33
  %v44 = vunpack.c.l.b16 %v34
  %v45 = vpack.c.b16 %v44, %v43
  %v48 = vunpack.c.l.b16 %v35
  %v49 = vunpack.c.l.b16 %v36
  %v50 = vpack.c.b16 %v49, %v48
  %vm52 = vcmask 130048
  %v54 = vsel %vm52, %v45, 0
  %56 = vmatpush.bf16.msra.mxu0 0
  %57 = vmatpush.bf16.msra.mxu0 0
  %58 = vmatpush.bf16.msra.mxu0 0
  %59 = vmatpush.bf16.msra.mxu0 0
  %60 = vmatpush.bf16.msra.mxu0 0
  %61 = vmatpush.bf16.msra.mxu0 0
  %62 = vmatpush.bf16.msra.mxu0 0
  %63 = vmatpush.bf16.msra.mxu0 %v50
  %64 = vmatmul.bf16.gmra.mxu0 %v54
  %v65 = vpop.f32.mrf.mxu0
  %v66 = vadd.f32 %v39, %v65
  %v67 = vpop.f32.mrf.mxu0
  %v68 = vadd.f32 %v39, %v67
  %69 = vdwg.mxu0
  %v70 = vmax.f32 %v66, 0.0
  %v71 = vmax.f32 %v68, 0.0
  %v72 = vpack.c.bf16 %v71, %v70
  %v73 = vld [vmem:[%s3] sm:$0xf]
  %v74 = vld [vmem:[%s3 + $0x4] sm:$0xf]
  %v75 = vld [vmem:[%s3 + $0x8] sm:$0xf]
  %v76 = vld [vmem:[%s3 + $0xc] sm:$0xf]
  %v77 = vld [vmem:[%s3 + $0x10] sm:$0xf]
  %v78 = vld [vmem:[%s3 + $0x14] sm:$0xf]
  %v79 = vld [vmem:[%s3 + $0x18] sm:$0xf]
  %v80 = vld [vmem:[%s3 + $0x1c] sm:$0xf]
  %v81 = vld [vmem:[%s3 + $0x20] sm:$0xf]
  %v82 = vld [vmem:[%s3 + $0x24] sm:$0xf]
  %v83 = vld [vmem:[%s3 + $0x28] sm:$0xf]
  %v84 = vld [vmem:[%s3 + $0x2c] sm:$0xf]
  %v85 = vld [vmem:[%s3 + $0x30] sm:$0xf]
  %v86 = vld [vmem:[%s3 + $0x34] sm:$0xf]
  %v87 = vld [vmem:[%s3 + $0x38] sm:$0xf]
  %v88 = vld [vmem:[%s3 + $0x3c] sm:$0xf]
  %v89 = vld [vmem:[%s4] sm:$0x1]
  %v91 = vperm.slane %v89, 0
  %v109 = vunpack.c.l.b16 %v73
  %v110 = vunpack.c.l.b16 %v74
  %v111 = vunpack.c.l.b16 %v75
  %v112 = vunpack.c.l.b16 %v76
  %v113 = vunpack.c.l.b16 %v77
  %v114 = vunpack.c.l.b16 %v78
  %v115 = vunpack.c.l.b16 %v79
  %v116 = vunpack.c.l.b16 %v80
  %v117 = vunpack.c.l.b16 %v81
  %v118 = vunpack.c.l.b16 %v82
  %v119 = vunpack.c.l.b16 %v83
  %v120 = vunpack.c.l.b16 %v84
  %v121 = vunpack.c.l.b16 %v85
  %v122 = vunpack.c.l.b16 %v86
  %v123 = vunpack.c.l.b16 %v87
  %v124 = vunpack.c.l.b16 %v88
  %v125 = vpack.c.b16 %v110, %v109
  %v126 = vpack.c.b16 %v112, %v111
  %v127 = vpack.c.b16 %v114, %v113
  %v128 = vpack.c.b16 %v116, %v115
  %v129 = vpack.c.b16 %v118, %v117
  %v130 = vpack.c.b16 %v120, %v119
  %v131 = vpack.c.b16 %v122, %v121
  %v132 = vpack.c.b16 %v124, %v123
  %141 = vmatpush.bf16.msra.mxu0 %v132
  %142 = vmatpush.bf16.msra.mxu0 %v131
  %143 = vmatpush.bf16.msra.mxu0 %v130
  %144 = vmatpush.bf16.msra.mxu0 %v129
  %145 = vmatpush.bf16.msra.mxu0 %v128
  %146 = vmatpush.bf16.msra.mxu0 %v127
  %147 = vmatpush.bf16.msra.mxu0 %v126
  %148 = vmatpush.bf16.msra.mxu0 %v125
  %149 = vmatmul.bf16.gmra.mxu0 %v72
  %v150 = vpop.f32.mrf.mxu0
  %v151 = vadd.f32 %v91, %v150
  %v152 = vpop.f32.mrf.mxu0
  %v153 = vadd.f32 %v91, %v152
  %154 = vdwg.mxu0
  %v155 = vmax.f32 %v151, 0.0
  %v156 = vmax.f32 %v153, 0.0
  %v157 = vpack.c.bf16 %v156, %v155
  %v158 = vld [vmem:[%s5] sm:$0xf]
  %v159 = vld [vmem:[%s5 + $0x4] sm:$0xf]
  %v160 = vld [vmem:[%s5 + $0x8] sm:$0xf]
  %v161 = vld [vmem:[%s5 + $0xc] sm:$0xf]
  %v162 = vld [vmem:[%s5 + $0x10] sm:$0xf]
  %v163 = vld [vmem:[%s5 + $0x14] sm:$0xf]
  %v164 = vld [vmem:[%s5 + $0x18] sm:$0xf]
  %v165 = vld [vmem:[%s5 + $0x1c] sm:$0xf]
  %v166 = vld [vmem:[%s5 + $0x20] sm:$0xf]
  %v167 = vld [vmem:[%s5 + $0x24] sm:$0xf]
  %v168 = vld [vmem:[%s5 + $0x28] sm:$0xf]
  %v169 = vld [vmem:[%s5 + $0x2c] sm:$0xf]
  %v170 = vld [vmem:[%s5 + $0x30] sm:$0xf]
  %v171 = vld [vmem:[%s5 + $0x34] sm:$0xf]
  %v172 = vld [vmem:[%s5 + $0x38] sm:$0xf]
  %v173 = vld [vmem:[%s5 + $0x3c] sm:$0xf]
  %v174 = vld [vmem:[%s6] sm:$0x1]
  %v176 = vperm.slane %v174, 0
  %v194 = vunpack.c.l.b16 %v158
  %v195 = vunpack.c.l.b16 %v159
  %v196 = vunpack.c.l.b16 %v160
  %v197 = vunpack.c.l.b16 %v161
  %v198 = vunpack.c.l.b16 %v162
  %v199 = vunpack.c.l.b16 %v163
  %v200 = vunpack.c.l.b16 %v164
  %v201 = vunpack.c.l.b16 %v165
  %v202 = vunpack.c.l.b16 %v166
  %v203 = vunpack.c.l.b16 %v167
  %v204 = vunpack.c.l.b16 %v168
  %v205 = vunpack.c.l.b16 %v169
  %v206 = vunpack.c.l.b16 %v170
  %v207 = vunpack.c.l.b16 %v171
  %v208 = vunpack.c.l.b16 %v172
  %v209 = vunpack.c.l.b16 %v173
  %v210 = vpack.c.b16 %v195, %v194
  %v211 = vpack.c.b16 %v197, %v196
  %v212 = vpack.c.b16 %v199, %v198
  %v213 = vpack.c.b16 %v201, %v200
  %v214 = vpack.c.b16 %v203, %v202
  %v215 = vpack.c.b16 %v205, %v204
  %v216 = vpack.c.b16 %v207, %v206
  %v217 = vpack.c.b16 %v209, %v208
  %226 = vmatpush.bf16.msra.mxu0 %v217
  %227 = vmatpush.bf16.msra.mxu0 %v216
  %228 = vmatpush.bf16.msra.mxu0 %v215
  %229 = vmatpush.bf16.msra.mxu0 %v214
  %230 = vmatpush.bf16.msra.mxu0 %v213
  %231 = vmatpush.bf16.msra.mxu0 %v212
  %232 = vmatpush.bf16.msra.mxu0 %v211
  %233 = vmatpush.bf16.msra.mxu0 %v210
  %234 = vmatmul.bf16.gmra.mxu0 %v157
  %v235 = vpop.f32.mrf.mxu0
  %v236 = vadd.f32 %v176, %v235
  %v237 = vpop.f32.mrf.mxu0
  %v238 = vadd.f32 %v176, %v237
  %239 = vdwg.mxu0
  %v240 = vmax.f32 %v236, 0.0
  %v241 = vmax.f32 %v238, 0.0
  %v242 = vpack.c.bf16 %v241, %v240
  %v243 = vld [vmem:[%s7] sm:$0xf]
  %v244 = vld [vmem:[%s7 + $0x4] sm:$0xf]
  %v245 = vld [vmem:[%s7 + $0x8] sm:$0xf]
  %v246 = vld [vmem:[%s7 + $0xc] sm:$0xf]
  %v247 = vld [vmem:[%s7 + $0x10] sm:$0xf]
  %v248 = vld [vmem:[%s7 + $0x14] sm:$0xf]
  %v249 = vld [vmem:[%s7 + $0x18] sm:$0xf]
  %v250 = vld [vmem:[%s7 + $0x1c] sm:$0xf]
  %v251 = vld [vmem:[%s7 + $0x20] sm:$0xf]
  %v252 = vld [vmem:[%s7 + $0x24] sm:$0xf]
  %v253 = vld [vmem:[%s7 + $0x28] sm:$0xf]
  %v254 = vld [vmem:[%s7 + $0x2c] sm:$0xf]
  %v255 = vld [vmem:[%s7 + $0x30] sm:$0xf]
  %v256 = vld [vmem:[%s7 + $0x34] sm:$0xf]
  %v257 = vld [vmem:[%s7 + $0x38] sm:$0xf]
  %v258 = vld [vmem:[%s7 + $0x3c] sm:$0xf]
  %v259 = vld [vmem:[%s8] sm:$0x1]
  %v261 = vperm.slane %v259, 0
  %v279 = vunpack.c.l.b16 %v243
  %v280 = vunpack.c.l.b16 %v244
  %v281 = vunpack.c.l.b16 %v245
  %v282 = vunpack.c.l.b16 %v246
  %v283 = vunpack.c.l.b16 %v247
  %v284 = vunpack.c.l.b16 %v248
  %v285 = vunpack.c.l.b16 %v249
  %v286 = vunpack.c.l.b16 %v250
  %v287 = vunpack.c.l.b16 %v251
  %v288 = vunpack.c.l.b16 %v252
  %v289 = vunpack.c.l.b16 %v253
  %v290 = vunpack.c.l.b16 %v254
  %v291 = vunpack.c.l.b16 %v255
  %v292 = vunpack.c.l.b16 %v256
  %v293 = vunpack.c.l.b16 %v257
  %v294 = vunpack.c.l.b16 %v258
  %v295 = vpack.c.b16 %v280, %v279
  %v296 = vpack.c.b16 %v282, %v281
  %v297 = vpack.c.b16 %v284, %v283
  %v298 = vpack.c.b16 %v286, %v285
  %v299 = vpack.c.b16 %v288, %v287
  %v300 = vpack.c.b16 %v290, %v289
  %v301 = vpack.c.b16 %v292, %v291
  %v302 = vpack.c.b16 %v294, %v293
  %311 = vmatpush.bf16.msra.mxu0 %v302
  %312 = vmatpush.bf16.msra.mxu0 %v301
  %313 = vmatpush.bf16.msra.mxu0 %v300
  %314 = vmatpush.bf16.msra.mxu0 %v299
  %315 = vmatpush.bf16.msra.mxu0 %v298
  %316 = vmatpush.bf16.msra.mxu0 %v297
  %317 = vmatpush.bf16.msra.mxu0 %v296
  %318 = vmatpush.bf16.msra.mxu0 %v295
  %319 = vmatmul.bf16.gmra.mxu0 %v242
  %v320 = vpop.f32.mrf.mxu0
  %v321 = vadd.f32 %v261, %v320
  %v322 = vpop.f32.mrf.mxu0
  %v323 = vadd.f32 %v261, %v322
  %324 = vdwg.mxu0
  %325 = vst [vmem:[%s9] sm:$0xff] %v321
  %326 = vst [vmem:[%s9 + $0x8] sm:$0xff] %v323
  // Predicated region
  $region38: #{dnn_forward.1} parent=0 // pred_check
    _
  $region39: #{dnn_forward.1} parent=0 // pred_check_branch
    %328 = sbr.rel (0) target = $region41
  $region40: #{dnn_forward.1} parent=0 // pred_region
    _
  $region41: #{dnn_forward.1} parent=0 // pred_fallthru
    _
  // Predicated region
  $region42: #{dnn_forward.1} parent=0 // pred_check
    _
  $region43: #{dnn_forward.1} parent=0 // pred_check_branch
    %330 = sbr.rel (0) target = $region45
  $region44: #{dnn_forward.1} parent=0 // pred_region
    _
  $region45: #{dnn_forward.1} parent=0 // pred_fallthru
    _

</llo_original>
